<compile_context>
chip_gen: v7x
topology: tpu7x:2x2x1
jax: 0.10.0
libtpu: 0.0.40
codegen_flags: <defaults>
</compile_context>

<pallas_src>
import jax
import jax.numpy as jnp
from jax.experimental import pallas as pl
from jax.experimental.pallas import tpu as pltpu


def _round_up(x, m):
    return (x + m - 1) // m * m


def _make_encoder_kernel(n_layers, compute_dtype):
    """Fused kernel: all layers, A resident in VMEM, H in a VMEM scratch."""

    def kernel(a_ref, x_ref, w_ref, b_ref, o_ref, h_ref):
        # Load initial activations into the resident VMEM scratch.
        h_ref[...] = x_ref[...]

        for l in range(n_layers):  # small static loop (unrolled)
            a = a_ref[...]                                  # (Np, Np) compute_dtype
            h = h_ref[...].astype(compute_dtype)            # (Np, Fp)

            # 1) scatter-add message aggregation as a dense MXU matmul
            #    (f32 accumulation regardless of operand dtype).
            agg = jnp.dot(a, h, preferred_element_type=jnp.float32)

            # 2) Linear layer: (Np, Fp) @ (Fp, Fp) + (1, Fp).
            #    All layer widths are padded to the same Fp, so both matmul
            #    associations cost the same; for asymmetric padded widths one
            #    would compute A @ (H @ W) whenever out_pad < in_pad.
            lin = jnp.dot(agg.astype(compute_dtype), w_ref[l],
                          preferred_element_type=jnp.float32) + b_ref[l]

            # 3) relu(leaky_relu(x, 0.01)) == relu(x)
            h_ref[...] = jnp.maximum(lin, 0.0)

        o_ref[...] = h_ref[...].astype(o_ref.dtype)

    return kernel


def build_aggregation_matrix(n_pad, edge_index, edge_attr, dtype=jnp.float32):
    """Dense padded aggregation matrix: A[dst, src] += 1 / edge_attr."""
    src = edge_index[0]
    dst = edge_index[1]
    inv = (1.0 / edge_attr).astype(jnp.float32)
    a = jnp.zeros((n_pad, n_pad), jnp.float32).at[dst, src].add(inv)
    return a.astype(dtype)


def grafiti_encoder_forward_dense(x, a, params, compute_dtype=jnp.float32):
    """Run the fused encoder given a prebuilt (padded) aggregation matrix."""
    n, in_dim = x.shape
    n_pad = a.shape[0]
    dims = [in_dim] + [w.shape[0] for (w, _) in params]
    n_layers = len(params)
    f_pad = _round_up(max(dims), 128)          # lane-dense feature width

    # Zero-padded initial activations (kept padded across all layers).
    x_pad = jnp.zeros((n_pad, f_pad), jnp.float32)
    x_pad = x_pad.at[:n, :in_dim].set(jnp.asarray(x, jnp.float32))

    # Stacked, pre-transposed (in, out), zero-padded weights / biases.
    w_stack = jnp.zeros((n_layers, f_pad, f_pad), jnp.float32)
    b_stack = jnp.zeros((n_layers, 1, f_pad), jnp.float32)
    for l, (w, b) in enumerate(params):
        out_d, in_d = w.shape
        w_stack = w_stack.at[l, :in_d, :out_d].set(jnp.asarray(w, jnp.float32).T)
        b_stack = b_stack.at[l, 0, :out_d].set(jnp.asarray(b, jnp.float32))
    w_stack = w_stack.astype(compute_dtype)

    # Scoped-VMEM budget: everything resident + scratch, with margin,
    # capped at 64 MiB so it stays within v7x physical VMEM.
    itemsize = jnp.dtype(compute_dtype).itemsize
    need = (a.size * itemsize            # A
            + x_pad.nbytes               # H0
            + w_stack.size * itemsize    # weights
            + b_stack.nbytes             # biases
            + 2 * n_pad * f_pad * 4)     # output + H scratch (f32)
    vmem_limit = int(min(max(3 * need, 32 * 1024 * 1024), 64 * 1024 * 1024))

    kernel = _make_encoder_kernel(n_layers, compute_dtype)
    out_pad = pl.pallas_call(
        kernel,
        out_shape=jax.ShapeDtypeStruct((n_pad, f_pad), jnp.float32),
        grid=(1,),
        in_specs=[
            pl.BlockSpec((n_pad, n_pad), lambda i: (0, 0)),                 # A
            pl.BlockSpec((n_pad, f_pad), lambda i: (0, 0)),                 # H0
            pl.BlockSpec((n_layers, f_pad, f_pad), lambda i: (0, 0, 0)),    # W stack
            pl.BlockSpec((n_layers, 1, f_pad), lambda i: (0, 0, 0)),        # b stack
        ],
        out_specs=pl.BlockSpec((n_pad, f_pad), lambda i: (0, 0)),
        scratch_shapes=[pltpu.VMEM((n_pad, f_pad), jnp.float32)],           # resident H
        compiler_params=pltpu.CompilerParams(
            dimension_semantics=("arbitrary",),
            vmem_limit_bytes=vmem_limit,
        ),
    )(a, x_pad, w_stack, b_stack)

    return out_pad[:n, :dims[-1]]


def grafiti_encoder_forward(x, edge_index, edge_attr, params,
                            compute_dtype=jnp.float32):
    """Full forward: build A (reusable when edges are static) + fused kernel."""
    n = x.shape[0]
    n_pad = _round_up(max(n, 8), 128)
    a = build_aggregation_matrix(n_pad, edge_index, edge_attr, compute_dtype)
    return grafiti_encoder_forward_dense(x, a, params, compute_dtype)


def init_params(key, in_dim, layers=(10, 10)):
    """Deterministic PyTorch-Linear-style init (uniform +/- 1/sqrt(fan_in))."""
    params = []
    dims = [in_dim] + list(layers)
    for i in range(len(layers)):
        key, kw, kb = jax.random.split(key, 3)
        fan_in = dims[i]
        bound = 1.0 / float(jnp.sqrt(float(fan_in)))
        w = jax.random.uniform(kw, (dims[i + 1], dims[i]), jnp.float32, -bound, bound)
        b = jax.random.uniform(kb, (dims[i + 1],), jnp.float32, -bound, bound)
        params.append((w, b))
    return params


def ref_forward(x, edge_index, edge_attr, params):
    """Pure-JAX reference mirroring the PyTorch semantics (edge-wise scatter)."""
    src, dst = edge_index[0], edge_index[1]
    h = jnp.asarray(x, jnp.float32)
    for (w, b) in params:
        msg = h[src] / edge_attr[:, None].astype(h.dtype)
        agg = jnp.zeros_like(h).at[dst].add(msg)
        lin = agg @ w.T + b
        lrelu = jnp.where(lin >= 0.0, lin, 0.01 * lin)
        h = jnp.maximum(lrelu, 0.0)
    return h


if __name__ == "__main__":
    key = jax.random.PRNGKey(0)
    k_x, k_ei, k_ea, k_p = jax.random.split(key, 4)

    N = 16        # number of graph nodes
    IN_DIM = 8    # input feature dim
    E = 48        # number of edges
    LAYERS = (10, 10)

    x = jax.random.normal(k_x, (N, IN_DIM), jnp.float32)
    edge_index = jax.random.randint(k_ei, (2, E), 0, N, jnp.int32)
    edge_attr = jax.random.uniform(k_ea, (E,), jnp.float32, 1.0, 2.0)  # positive weights
    params = init_params(k_p, IN_DIM, LAYERS)

    ref = ref_forward(x, edge_index, edge_attr, params)

    # f32 matmul operands: tight tolerance vs. reference.
    out_f32 = jax.block_until_ready(
        grafiti_encoder_forward(x, edge_index, edge_attr, params,
                                compute_dtype=jnp.float32))
    assert out_f32.shape == (N, LAYERS[-1])
    assert jnp.allclose(out_f32, ref, rtol=1e-5, atol=1e-4), "f32 mismatch vs reference"

    # bf16 matmul operands with f32 MXU accumulation: native MXU path,
    # validated at a bf16-appropriate tolerance.
    out_bf16 = jax.block_until_ready(
        grafiti_encoder_forward(x, edge_index, edge_attr, params,
                                compute_dtype=jnp.bfloat16))
    assert out_bf16.shape == (N, LAYERS[-1])
    assert jnp.allclose(out_bf16, ref, rtol=5e-2, atol=5e-2), "bf16 mismatch vs reference"

    print("KERNEL_OK")
</pallas_src>

<mosaic_0001>
module attributes {stable_mosaic.version = 11 : i64} {
  func.func @kernel(%arg0: i32, %arg1: memref<128x128xf32, #tpu.memory_space<vmem>>, %arg2: memref<128x128xf32, #tpu.memory_space<vmem>>, %arg3: memref<2x128x128xf32, #tpu.memory_space<vmem>>, %arg4: memref<2x1x128xf32, #tpu.memory_space<vmem>>, %arg5: memref<128x128xf32, #tpu.memory_space<vmem>>, %arg6: memref<128x128xf32, #tpu.memory_space<vmem>>) attributes {dimension_semantics = [#tpu.dimension_semantics<arbitrary>], iteration_bounds = array<i64: 1>, scalar_prefetch = 0 : i64, scratch_operands = 1 : i64, tpu.core_type = #tpu.core_type<tc>, window_params = [{pipeline_mode = #tpu.pipeline_mode<synchronous>, transform_indices = @transform_0, window_bounds = array<i64: 128, 128>}, {pipeline_mode = #tpu.pipeline_mode<synchronous>, transform_indices = @transform_1, window_bounds = array<i64: 128, 128>}, {pipeline_mode = #tpu.pipeline_mode<synchronous>, transform_indices = @transform_2, window_bounds = array<i64: 2, 128, 128>}, {pipeline_mode = #tpu.pipeline_mode<synchronous>, transform_indices = @transform_3, window_bounds = array<i64: 2, 1, 128>}, {pipeline_mode = #tpu.pipeline_mode<synchronous>, transform_indices = @transform_4, window_bounds = array<i64: 128, 128>}]} {
    %c0 = arith.constant 0 : index
    %c0_0 = arith.constant 0 : index
    %0 = vector.load %arg2[%c0, %c0_0] : memref<128x128xf32, #tpu.memory_space<vmem>>, vector<128x128xf32>
    %c0_1 = arith.constant 0 : index
    %c0_2 = arith.constant 0 : index
    %1 = vector.load %arg6[%c0_1, %c0_2] : memref<128x128xf32, #tpu.memory_space<vmem>>, vector<128x128xf32>
    tpu.vector_store %arg6[%c0_1, %c0_2], %0 {strides = array<i32>} : memref<128x128xf32, #tpu.memory_space<vmem>>, vector<128x128xf32>,
    %c0_3 = arith.constant 0 : index
    %c0_4 = arith.constant 0 : index
    %2 = vector.load %arg1[%c0_3, %c0_4] : memref<128x128xf32, #tpu.memory_space<vmem>>, vector<128x128xf32>
    %c0_5 = arith.constant 0 : index
    %c0_6 = arith.constant 0 : index
    %3 = vector.load %arg6[%c0_5, %c0_6] : memref<128x128xf32, #tpu.memory_space<vmem>>, vector<128x128xf32>
    %cst = arith.constant dense<0.000000e+00> : vector<128x128xf32>
    %4 = tpu.matmul %2, %3, %cst {dimension_numbers = #tpu.dot_dimension_numbers<[1], [0], [0], [1], [0, 0, 1, 1], [], []>} : vector<128x128xf32>, vector<128x128xf32>, vector<128x128xf32> -> vector<128x128xf32>
    %c0_7 = arith.constant 0 : index
    %c0_8 = arith.constant 0 : index
    %c0_9 = arith.constant 0 : index
    %5 = vector.load %arg3[%c0_7, %c0_8, %c0_9] : memref<2x128x128xf32, #tpu.memory_space<vmem>>, vector<1x128x128xf32>
    %6 = vector.shape_cast %5 : vector<1x128x128xf32> to vector<128x128xf32>
    %cst_10 = arith.constant dense<0.000000e+00> : vector<128x128xf32>
    %7 = tpu.matmul %4, %6, %cst_10 {dimension_numbers = #tpu.dot_dimension_numbers<[1], [0], [0], [1], [0, 0, 1, 1], [], []>} : vector<128x128xf32>, vector<128x128xf32>, vector<128x128xf32> -> vector<128x128xf32>
    %c0_11 = arith.constant 0 : index
    %c0_12 = arith.constant 0 : index
    %c0_13 = arith.constant 0 : index
    %8 = vector.load %arg4[%c0_11, %c0_12, %c0_13] : memref<2x1x128xf32, #tpu.memory_space<vmem>>, vector<1x1x128xf32>
    %9 = vector.shape_cast %8 : vector<1x1x128xf32> to vector<1x128xf32>
    %10 = vector.broadcast %9 : vector<1x128xf32> to vector<128x128xf32>
    %11 = arith.addf %7, %10 : vector<128x128xf32>
    %cst_14 = arith.constant 0.000000e+00 : f32
    %12 = vector.broadcast %cst_14 : f32 to vector<128x128xf32>
    %13 = arith.maximumf %11, %12 : vector<128x128xf32>
    %c0_15 = arith.constant 0 : index
    %c0_16 = arith.constant 0 : index
    %14 = vector.load %arg6[%c0_15, %c0_16] : memref<128x128xf32, #tpu.memory_space<vmem>>, vector<128x128xf32>
    tpu.vector_store %arg6[%c0_15, %c0_16], %13 {strides = array<i32>} : memref<128x128xf32, #tpu.memory_space<vmem>>, vector<128x128xf32>,
    %c0_17 = arith.constant 0 : index
    %c0_18 = arith.constant 0 : index
    %15 = vector.load %arg1[%c0_17, %c0_18] : memref<128x128xf32, #tpu.memory_space<vmem>>, vector<128x128xf32>
    %c0_19 = arith.constant 0 : index
    %c0_20 = arith.constant 0 : index
    %16 = vector.load %arg6[%c0_19, %c0_20] : memref<128x128xf32, #tpu.memory_space<vmem>>, vector<128x128xf32>
    %cst_21 = arith.constant dense<0.000000e+00> : vector<128x128xf32>
    %17 = tpu.matmul %15, %16, %cst_21 {dimension_numbers = #tpu.dot_dimension_numbers<[1], [0], [0], [1], [0, 0, 1, 1], [], []>} : vector<128x128xf32>, vector<128x128xf32>, vector<128x128xf32> -> vector<128x128xf32>
    %c1 = arith.constant 1 : index
    %c0_22 = arith.constant 0 : index
    %c0_23 = arith.constant 0 : index
    %18 = vector.load %arg3[%c1, %c0_22, %c0_23] : memref<2x128x128xf32, #tpu.memory_space<vmem>>, vector<1x128x128xf32>
    %19 = vector.shape_cast %18 : vector<1x128x128xf32> to vector<128x128xf32>
    %cst_24 = arith.constant dense<0.000000e+00> : vector<128x128xf32>
    %20 = tpu.matmul %17, %19, %cst_24 {dimension_numbers = #tpu.dot_dimension_numbers<[1], [0], [0], [1], [0, 0, 1, 1], [], []>} : vector<128x128xf32>, vector<128x128xf32>, vector<128x128xf32> -> vector<128x128xf32>
    %c1_25 = arith.constant 1 : index
    %c0_26 = arith.constant 0 : index
    %c0_27 = arith.constant 0 : index
    %21 = vector.load %arg4[%c1_25, %c0_26, %c0_27] : memref<2x1x128xf32, #tpu.memory_space<vmem>>, vector<1x1x128xf32>
    %22 = vector.shape_cast %21 : vector<1x1x128xf32> to vector<1x128xf32>
    %23 = vector.broadcast %22 : vector<1x128xf32> to vector<128x128xf32>
    %24 = arith.addf %20, %23 : vector<128x128xf32>
    %cst_28 = arith.constant 0.000000e+00 : f32
    %25 = vector.broadcast %cst_28 : f32 to vector<128x128xf32>
    %26 = arith.maximumf %24, %25 : vector<128x128xf32>
    %c0_29 = arith.constant 0 : index
    %c0_30 = arith.constant 0 : index
    %27 = vector.load %arg6[%c0_29, %c0_30] : memref<128x128xf32, #tpu.memory_space<vmem>>, vector<128x128xf32>
    tpu.vector_store %arg6[%c0_29, %c0_30], %26 {strides = array<i32>} : memref<128x128xf32, #tpu.memory_space<vmem>>, vector<128x128xf32>,
    %c0_31 = arith.constant 0 : index
    %c0_32 = arith.constant 0 : index
    %28 = vector.load %arg6[%c0_31, %c0_32] : memref<128x128xf32, #tpu.memory_space<vmem>>, vector<128x128xf32>
    %c0_33 = arith.constant 0 : index
    %c0_34 = arith.constant 0 : index
    %29 = vector.load %arg5[%c0_33, %c0_34] : memref<128x128xf32, #tpu.memory_space<vmem>>, vector<128x128xf32>
    tpu.vector_store %arg5[%c0_33, %c0_34], %28 {strides = array<i32>} : memref<128x128xf32, #tpu.memory_space<vmem>>, vector<128x128xf32>,
    return
  }
  func.func @transform_0(%arg0: i32) -> (i32, i32) {
    %c0_i32 = arith.constant 0 : i32
    %c0_i32_0 = arith.constant 0 : i32
    %c0_i32_1 = arith.constant 0 : i32
    return %c0_i32, %c0_i32_0 : i32, i32
  }
  func.func @transform_1(%arg0: i32) -> (i32, i32) {
    %c0_i32 = arith.constant 0 : i32
    %c0_i32_0 = arith.constant 0 : i32
    %c0_i32_1 = arith.constant 0 : i32
    return %c0_i32, %c0_i32_0 : i32, i32
  }
  func.func @transform_2(%arg0: i32) -> (i32, i32, i32) {
    %c0_i32 = arith.constant 0 : i32
    %c0_i32_0 = arith.constant 0 : i32
    %c0_i32_1 = arith.constant 0 : i32
    %c0_i32_2 = arith.constant 0 : i32
    return %c0_i32, %c0_i32_0, %c0_i32_1 : i32, i32, i32
  }
  func.func @transform_3(%arg0: i32) -> (i32, i32, i32) {
    %c0_i32 = arith.constant 0 : i32
    %c0_i32_0 = arith.constant 0 : i32
    %c0_i32_1 = arith.constant 0 : i32
    %c0_i32_2 = arith.constant 0 : i32
    return %c0_i32, %c0_i32_0, %c0_i32_1 : i32, i32, i32
  }
  func.func @transform_4(%arg0: i32) -> (i32, i32) {
    %c0_i32 = arith.constant 0 : i32
    %c0_i32_0 = arith.constant 0 : i32
    %c0_i32_1 = arith.constant 0 : i32
    return %c0_i32, %c0_i32_0 : i32, i32
  }
}

</mosaic_0001>

<llo_original>
// kernel: tpu_custom_call.1
$region0: #{tpu_custom_call.1}
  #allocation0 [shape = 'u32[]', space=smem, size = 0x4, offset = 0x4, fixed_abs, tag = 'smem constant byte address 0x4 - core index']
  #allocation1 [shape = 'u32[144,128]{1,0:T(1,128)}', space=vmem, size = 0x12000, scoped, tag = 'internal scratch']
  #allocation2 [shape = 'f32[128,128]{1,0:T(8,128)}', space=vmem, size = 0x10000, scoped, tag = 'scratch operand']
  %s0 = inlined_call_operand.hbm [shape: f32[128,128], index: 0, kind: input, shape index: {}]
  %s1 = inlined_call_operand.hbm [shape: f32[128,128], index: 1, kind: input, shape index: {}]
  %s2 = inlined_call_operand.hbm [shape: f32[2,128,128], index: 2, kind: input, shape index: {}]
  %s3 = inlined_call_operand.vmem [shape: f32[2,1,128], index: 3, kind: input, shape index: {}]
  %s4 = inlined_call_operand.hbm [shape: f32[128,128], index: 4, kind: output, shape index: {}]
  %s5 = sld [smem:[#allocation0]]
  $region38: #{tpu_custom_call.1} parent=0
    _
  %s7 = ssub.s32 1, %s5
  %s8 = scalar_select 0, %s7, %s5
  $region1: #{tpu_custom_call.1} parent=0
    #allocation3 [shape = 'u8[65536]{0}', space=vmem, size = 0x10000, scoped, tag = 'input window, operand 0, single buffered']
    #allocation4 [shape = 's32[1]{0}', space=sflag, size = 0x4, scoped, tag = 'scoped memory for tpu_custom_call.1']
    #allocation5 [shape = 's32[1]{0}', space=sflag, size = 0x4, scoped, tag = 'scoped memory for tpu_custom_call.1']
    #allocation6 [shape = 'u8[65536]{0}', space=vmem, size = 0x10000, scoped, tag = 'input window, operand 1, single buffered']
    #allocation7 [shape = 's32[1]{0}', space=sflag, size = 0x4, scoped, tag = 'scoped memory for tpu_custom_call.1']
    #allocation8 [shape = 'u8[131072]{0}', space=vmem, size = 0x20000, scoped, tag = 'input window, operand 2, single buffered']
    #allocation9 [shape = 'u8[65536]{0}', space=vmem, size = 0x10000, scoped, tag = 'output window, operand 0, single buffered']
    %9 = vsyncpa [#allocation4], 0
    %10 = vsyncpa [#allocation7], 0
    %11 = vsyncpa [#allocation5], 0
    // Predicated region
    $region2: #{tpu_custom_call.1} parent=1 // pred_check
      _
    $region3: #{tpu_custom_call.1} parent=1 // pred_check_branch
      %13 = sbr.rel (0) target = $region5
    $region4: #{tpu_custom_call.1} parent=1 // pred_region
      %s15 = ssub.s32 2048, 2048
      %16 = vsyncadd [#allocation4], %s15
      %s17 = sshll.u32 [#allocation3], 4
      %s18 = int_to_ptr.vmem [resolvable:$true] %s17
      %23 = dma.hbm_to_vmem [thread:$0]  %s0, 2048, %s18, [#allocation4], 128, 128, 8
    $region5: #{tpu_custom_call.1} parent=1 // pred_fallthru
      _
    // Predicated region
    $region6: #{tpu_custom_call.1} parent=1 // pred_check
      _
    $region7: #{tpu_custom_call.1} parent=1 // pred_check_branch
      %25 = sbr.rel (0) target = $region9
    $region8: #{tpu_custom_call.1} parent=1 // pred_region
      %s27 = ssub.s32 2048, 2048
      %28 = vsyncadd [#allocation7], %s27
      %s29 = sshll.u32 [#allocation6], 4
      %s30 = int_to_ptr.vmem [resolvable:$true] %s29
      %35 = dma.hbm_to_vmem [thread:$0]  %s1, 2048, %s30, [#allocation7], 128, 128, 8
    $region9: #{tpu_custom_call.1} parent=1 // pred_fallthru
      _
    // Predicated region
    $region10: #{tpu_custom_call.1} parent=1 // pred_check
      _
    $region11: #{tpu_custom_call.1} parent=1 // pred_check_branch
      %37 = sbr.rel (0) target = $region13
    $region12: #{tpu_custom_call.1} parent=1 // pred_region
      %s39 = ssub.s32 4096, 4096
      %40 = vsyncadd [#allocation7], %s39
      %s41 = sshll.u32 [#allocation8], 4
      %s42 = int_to_ptr.vmem [resolvable:$true] %s41
      %47 = dma.hbm_to_vmem [thread:$0]  %s2, 4096, %s42, [#allocation7], 128, 128, 8
    $region13: #{tpu_custom_call.1} parent=1 // pred_fallthru
      _
    // Predicated region
    $region14: #{tpu_custom_call.1} parent=1 // pred_check
      _
    $region15: #{tpu_custom_call.1} parent=1 // pred_check_branch
      %49 = sbr.rel (0) target = $region17
    $region16: #{tpu_custom_call.1} parent=1 // pred_region
      _
    $region17: #{tpu_custom_call.1} parent=1 // pred_fallthru
      _
    // Predicated region
    $region18: #{tpu_custom_call.1} parent=1 // pred_check
      _
    $region19: #{tpu_custom_call.1} parent=1 // pred_check_branch
      %51 = sbr.rel (0) target = $region21
    $region20: #{tpu_custom_call.1} parent=1 // pred_region
      %52 = dma.done [#allocation4], 2048
    $region21: #{tpu_custom_call.1} parent=1 // pred_fallthru
      _
    // Predicated region
    $region22: #{tpu_custom_call.1} parent=1 // pred_check
      _
    $region23: #{tpu_custom_call.1} parent=1 // pred_check_branch
      %54 = sbr.rel (0) target = $region25
    $region24: #{tpu_custom_call.1} parent=1 // pred_region
      %55 = dma.done [#allocation7], 2048
    $region25: #{tpu_custom_call.1} parent=1 // pred_fallthru
      _
    // Predicated region
    $region26: #{tpu_custom_call.1} parent=1 // pred_check
      _
    $region27: #{tpu_custom_call.1} parent=1 // pred_check_branch
      %57 = sbr.rel (0) target = $region29
    $region28: #{tpu_custom_call.1} parent=1 // pred_region
      %58 = dma.done [#allocation7], 4096
    $region29: #{tpu_custom_call.1} parent=1 // pred_fallthru
      _
    %v59 = vld [vmem:[#allocation6] sm:$0xff]
    %v60 = vld [vmem:[#allocation6 + $0x8] sm:$0xff]
    %v61 = vld [vmem:[#allocation6 + $0x10] sm:$0xff]
    %v62 = vld [vmem:[#allocation6 + $0x18] sm:$0xff]
    %v63 = vld [vmem:[#allocation6 + $0x20] sm:$0xff]
    %v64 = vld [vmem:[#allocation6 + $0x28] sm:$0xff]
    %v65 = vld [vmem:[#allocation6 + $0x30] sm:$0xff]
    %v66 = vld [vmem:[#allocation6 + $0x38] sm:$0xff]
    %v67 = vld [vmem:[#allocation6 + $0x40] sm:$0xff]
    %v68 = vld [vmem:[#allocation6 + $0x48] sm:$0xff]
    %v69 = vld [vmem:[#allocation6 + $0x50] sm:$0xff]
    %v70 = vld [vmem:[#allocation6 + $0x58] sm:$0xff]
    %v71 = vld [vmem:[#allocation6 + $0x60] sm:$0xff]
    %v72 = vld [vmem:[#allocation6 + $0x68] sm:$0xff]
    %v73 = vld [vmem:[#allocation6 + $0x70] sm:$0xff]
    %v74 = vld [vmem:[#allocation6 + $0x78] sm:$0xff]
    %75 = vst [vmem:[#allocation2] sm:$0xff] %v59
    %76 = vst [vmem:[#allocation2 + $0x8] sm:$0xff] %v60
    %77 = vst [vmem:[#allocation2 + $0x10] sm:$0xff] %v61
    %78 = vst [vmem:[#allocation2 + $0x18] sm:$0xff] %v62
    %79 = vst [vmem:[#allocation2 + $0x20] sm:$0xff] %v63
    %80 = vst [vmem:[#allocation2 + $0x28] sm:$0xff] %v64
    %81 = vst [vmem:[#allocation2 + $0x30] sm:$0xff] %v65
    %82 = vst [vmem:[#allocation2 + $0x38] sm:$0xff] %v66
    %83 = vst [vmem:[#allocation2 + $0x40] sm:$0xff] %v67
    %84 = vst [vmem:[#allocation2 + $0x48] sm:$0xff] %v68
    %85 = vst [vmem:[#allocation2 + $0x50] sm:$0xff] %v69
    %86 = vst [vmem:[#allocation2 + $0x58] sm:$0xff] %v70
    %87 = vst [vmem:[#allocation2 + $0x60] sm:$0xff] %v71
    %88 = vst [vmem:[#allocation2 + $0x68] sm:$0xff] %v72
    %89 = vst [vmem:[#allocation2 + $0x70] sm:$0xff] %v73
    %90 = vst [vmem:[#allocation2 + $0x78] sm:$0xff] %v74
    %v91 = vld [vmem:[#allocation3] sm:$0xff]
    %v92 = vld [vmem:[#allocation3 + $0x8] sm:$0xff]
    %v93 = vld [vmem:[#allocation3 + $0x10] sm:$0xff]
    %v94 = vld [vmem:[#allocation3 + $0x18] sm:$0xff]
    %v95 = vld [vmem:[#allocation3 + $0x20] sm:$0xff]
    %v96 = vld [vmem:[#allocation3 + $0x28] sm:$0xff]
    %v97 = vld [vmem:[#allocation3 + $0x30] sm:$0xff]
    %v98 = vld [vmem:[#allocation3 + $0x38] sm:$0xff]
    %v99 = vld [vmem:[#allocation3 + $0x40] sm:$0xff]
    %v100 = vld [vmem:[#allocation3 + $0x48] sm:$0xff]
    %v101 = vld [vmem:[#allocation3 + $0x50] sm:$0xff]
    %v102 = vld [vmem:[#allocation3 + $0x58] sm:$0xff]
    %v103 = vld [vmem:[#allocation3 + $0x60] sm:$0xff]
    %v104 = vld [vmem:[#allocation3 + $0x68] sm:$0xff]
    %v105 = vld [vmem:[#allocation3 + $0x70] sm:$0xff]
    %v106 = vld [vmem:[#allocation3 + $0x78] sm:$0xff]
    %v107 = vld [vmem:[#allocation2] sm:$0xff]
    %v108 = vld [vmem:[#allocation2 + $0x8] sm:$0xff]
    %v109 = vld [vmem:[#allocation2 + $0x10] sm:$0xff]
    %v110 = vld [vmem:[#allocation2 + $0x18] sm:$0xff]
    %v111 = vld [vmem:[#allocation2 + $0x20] sm:$0xff]
    %v112 = vld [vmem:[#allocation2 + $0x28] sm:$0xff]
    %v113 = vld [vmem:[#allocation2 + $0x30] sm:$0xff]
    %v114 = vld [vmem:[#allocation2 + $0x38] sm:$0xff]
    %v115 = vld [vmem:[#allocation2 + $0x40] sm:$0xff]
    %v116 = vld [vmem:[#allocation2 + $0x48] sm:$0xff]
    %v117 = vld [vmem:[#allocation2 + $0x50] sm:$0xff]
    %v118 = vld [vmem:[#allocation2 + $0x58] sm:$0xff]
    %v119 = vld [vmem:[#allocation2 + $0x60] sm:$0xff]
    %v120 = vld [vmem:[#allocation2 + $0x68] sm:$0xff]
    %v121 = vld [vmem:[#allocation2 + $0x70] sm:$0xff]
    %v122 = vld [vmem:[#allocation2 + $0x78] sm:$0xff]
    %123 = vmatprep.subr.mxu0 0.0
    %124 = vmatpush1.msra.mxu0 %v107
    %125 = vmatprep.subr.mxu0 0.0
    %126 = vmatpush1.msra.mxu0 %v108
    %127 = vmatprep.subr.mxu0 0.0
    %128 = vmatpush1.msra.mxu0 %v109
    %129 = vmatprep.subr.mxu0 0.0
    %130 = vmatpush1.msra.mxu0 %v110
    %131 = vmatprep.subr.mxu0 0.0
    %132 = vmatpush1.msra.mxu0 %v111
    %133 = vmatprep.subr.mxu0 0.0
    %134 = vmatpush1.msra.mxu0 %v112
    %135 = vmatprep.subr.mxu0 0.0
    %136 = vmatpush1.msra.mxu0 %v113
    %137 = vmatprep.subr.mxu0 0.0
    %138 = vmatpush1.msra.mxu0 %v114
    %139 = vmatprep.subr.mxu0 0.0
    %140 = vmatpush1.msra.mxu0 %v115
    %141 = vmatprep.subr.mxu0 0.0
    %142 = vmatpush1.msra.mxu0 %v116
    %143 = vmatprep.subr.mxu0 0.0
    %144 = vmatpush1.msra.mxu0 %v117
    %145 = vmatprep.subr.mxu0 0.0
    %146 = vmatpush1.msra.mxu0 %v118
    %147 = vmatprep.subr.mxu0 0.0
    %148 = vmatpush1.msra.mxu0 %v119
    %149 = vmatprep.subr.mxu0 0.0
    %150 = vmatpush1.msra.mxu0 %v120
    %151 = vmatprep.subr.mxu0 0.0
    %152 = vmatpush1.msra.mxu0 %v121
    %153 = vmatprep.subr.mxu0 0.0
    %154 = vmatpush1.msra.mxu0 %v122
    %155 = vmatprep.subr.mxu0 0.0
    %156 = vmatpush1.msra.mxu0 0.0
    %157 = vmatprep.subr.mxu0 0.0
    %158 = vmatpush1.msra.mxu0 0.0
    %159 = vmatprep.subr.mxu0 0.0
    %160 = vmatpush1.msra.mxu0 0.0
    %161 = vmatprep.subr.mxu0 0.0
    %162 = vmatpush1.msra.mxu0 0.0
    %163 = vmatprep.subr.mxu0 0.0
    %164 = vmatpush1.msra.mxu0 0.0
    %165 = vmatprep.subr.mxu0 0.0
    %166 = vmatpush1.msra.mxu0 0.0
    %167 = vmatprep.subr.mxu0 0.0
    %168 = vmatpush1.msra.mxu0 0.0
    %169 = vmatprep.subr.mxu0 0.0
    %170 = vmatpush1.msra.mxu0 0.0
    %171 = vmatprep.subr.mxu0 0.0
    %172 = vmatpush1.msra.mxu0 0.0
    %173 = vmatprep.subr.mxu0 0.0
    %174 = vmatpush1.msra.mxu0 0.0
    %175 = vmatprep.subr.mxu0 0.0
    %176 = vmatpush1.msra.mxu0 0.0
    %177 = vmatprep.subr.mxu0 0.0
    %178 = vmatpush1.msra.mxu0 0.0
    %179 = vmatprep.subr.mxu0 0.0
    %180 = vmatpush1.msra.mxu0 0.0
    %181 = vmatprep.subr.mxu0 0.0
    %182 = vmatpush1.msra.mxu0 0.0
    %183 = vmatprep.subr.mxu0 0.0
    %184 = vmatpush1.msra.mxu0 0.0
    %185 = vmatprep.subr.mxu0 0.0
    %186 = vmatpush1.msra.mxu0 0.0
    %187 = vmatprep.mubr.f32.mxu0 0.0
    %188 = vmatmul.mubr.f32.gmra.mrb[0].mxu0 %v91
    %v189 = vpop.f32.mrb[0].mxu0
    %v190 = vadd.f32 0.0, %v189
    %v191 = vpop.f32.mrb[0].mxu0
    %192 = vmatprep.mubr.f32.mxu0 0.0
    %193 = vmatmul.mubr.f32.gmra.mrb[0].mxu0 %v92
    %v194 = vpop.f32.mrb[0].mxu0
    %v195 = vadd.f32 0.0, %v194
    %v196 = vpop.f32.mrb[0].mxu0
    %197 = vmatprep.mubr.f32.mxu0 0.0
    %198 = vmatmul.mubr.f32.gmra.mrb[0].mxu0 %v93
    %v199 = vpop.f32.mrb[0].mxu0
    %v200 = vadd.f32 0.0, %v199
    %v201 = vpop.f32.mrb[0].mxu0
    %202 = vmatprep.mubr.f32.mxu0 0.0
    %203 = vmatmul.mubr.f32.gmra.mrb[0].mxu0 %v94
    %v204 = vpop.f32.mrb[0].mxu0
    %v205 = vadd.f32 0.0, %v204
    %v206 = vpop.f32.mrb[0].mxu0
    %207 = vmatprep.mubr.f32.mxu0 0.0
    %208 = vmatmul.mubr.f32.gmra.mrb[0].mxu0 %v95
    %v209 = vpop.f32.mrb[0].mxu0
    %v210 = vadd.f32 0.0, %v209
    %v211 = vpop.f32.mrb[0].mxu0
    %212 = vmatprep.mubr.f32.mxu0 0.0
    %213 = vmatmul.mubr.f32.gmra.mrb[0].mxu0 %v96
    %v214 = vpop.f32.mrb[0].mxu0
    %v215 = vadd.f32 0.0, %v214
    %v216 = vpop.f32.mrb[0].mxu0
    %217 = vmatprep.mubr.f32.mxu0 0.0
    %218 = vmatmul.mubr.f32.gmra.mrb[0].mxu0 %v97
    %v219 = vpop.f32.mrb[0].mxu0
    %v220 = vadd.f32 0.0, %v219
    %v221 = vpop.f32.mrb[0].mxu0
    %222 = vmatprep.mubr.f32.mxu0 0.0
    %223 = vmatmul.mubr.f32.gmra.mrb[0].mxu0 %v98
    %v224 = vpop.f32.mrb[0].mxu0
    %v225 = vadd.f32 0.0, %v224
    %v226 = vpop.f32.mrb[0].mxu0
    %227 = vmatprep.mubr.f32.mxu0 0.0
    %228 = vmatmul.mubr.f32.gmra.mrb[0].mxu0 %v99
    %v229 = vpop.f32.mrb[0].mxu0
    %v230 = vadd.f32 0.0, %v229
    %v231 = vpop.f32.mrb[0].mxu0
    %232 = vmatprep.mubr.f32.mxu0 0.0
    %233 = vmatmul.mubr.f32.gmra.mrb[0].mxu0 %v100
    %v234 = vpop.f32.mrb[0].mxu0
    %v235 = vadd.f32 0.0, %v234
    %v236 = vpop.f32.mrb[0].mxu0
    %237 = vmatprep.mubr.f32.mxu0 0.0
    %238 = vmatmul.mubr.f32.gmra.mrb[0].mxu0 %v101
    %v239 = vpop.f32.mrb[0].mxu0
    %v240 = vadd.f32 0.0, %v239
    %v241 = vpop.f32.mrb[0].mxu0
    %242 = vmatprep.mubr.f32.mxu0 0.0
    %243 = vmatmul.mubr.f32.gmra.mrb[0].mxu0 %v102
    %v244 = vpop.f32.mrb[0].mxu0
    %v245 = vadd.f32 0.0, %v244
    %v246 = vpop.f32.mrb[0].mxu0
    %247 = vmatprep.mubr.f32.mxu0 0.0
    %248 = vmatmul.mubr.f32.gmra.mrb[0].mxu0 %v103
    %v249 = vpop.f32.mrb[0].mxu0
    %v250 = vadd.f32 0.0, %v249
    %v251 = vpop.f32.mrb[0].mxu0
    %252 = vmatprep.mubr.f32.mxu0 0.0
    %253 = vmatmul.mubr.f32.gmra.mrb[0].mxu0 %v104
    %v254 = vpop.f32.mrb[0].mxu0
    %v255 = vadd.f32 0.0, %v254
    %v256 = vpop.f32.mrb[0].mxu0
    %257 = vmatprep.mubr.f32.mxu0 0.0
    %258 = vmatmul.mubr.f32.gmra.mrb[0].mxu0 %v105
    %v259 = vpop.f32.mrb[0].mxu0
    %v260 = vadd.f32 0.0, %v259
    %v261 = vpop.f32.mrb[0].mxu0
    %262 = vmatprep.mubr.f32.mxu0 0.0
    %263 = vmatmul.mubr.f32.gmra.mrb[0].mxu0 %v106
    %v264 = vpop.f32.mrb[0].mxu0
    %v265 = vadd.f32 0.0, %v264
    %v266 = vpop.f32.mrb[0].mxu0
    %267 = vdwg.mxu0
    %v268 = vld [vmem:[#allocation8] sm:$0xff]
    %v269 = vld [vmem:[#allocation8 + $0x8] sm:$0xff]
    %v270 = vld [vmem:[#allocation8 + $0x10] sm:$0xff]
    %v271 = vld [vmem:[#allocation8 + $0x18] sm:$0xff]
    %v272 = vld [vmem:[#allocation8 + $0x20] sm:$0xff]
    %v273 = vld [vmem:[#allocation8 + $0x28] sm:$0xff]
    %v274 = vld [vmem:[#allocation8 + $0x30] sm:$0xff]
    %v275 = vld [vmem:[#allocation8 + $0x38] sm:$0xff]
    %v276 = vld [vmem:[#allocation8 + $0x40] sm:$0xff]
    %v277 = vld [vmem:[#allocation8 + $0x48] sm:$0xff]
    %v278 = vld [vmem:[#allocation8 + $0x50] sm:$0xff]
    %v279 = vld [vmem:[#allocation8 + $0x58] sm:$0xff]
    %v280 = vld [vmem:[#allocation8 + $0x60] sm:$0xff]
    %v281 = vld [vmem:[#allocation8 + $0x68] sm:$0xff]
    %v282 = vld [vmem:[#allocation8 + $0x70] sm:$0xff]
    %v283 = vld [vmem:[#allocation8 + $0x78] sm:$0xff]
    %v284 = vld [vmem:[%s3] sm:$0x1]
    %v286 = vlaneseq
    %v287 = vshrl.u32 %v286, 7
    %v288 = vsub.s32 0, %v287
    %v289 = vrot.slane %v284, %v288
    %291 = vmatprep.subr.mxu0 0.0
    %292 = vmatpush1.msra.mxu0 %v268
    %293 = vmatprep.subr.mxu0 0.0
    %294 = vmatpush1.msra.mxu0 %v269
    %295 = vmatprep.subr.mxu0 0.0
    %296 = vmatpush1.msra.mxu0 %v270
    %297 = vmatprep.subr.mxu0 0.0
    %298 = vmatpush1.msra.mxu0 %v271
    %299 = vmatprep.subr.mxu0 0.0
    %300 = vmatpush1.msra.mxu0 %v272
    %301 = vmatprep.subr.mxu0 0.0
    %302 = vmatpush1.msra.mxu0 %v273
    %303 = vmatprep.subr.mxu0 0.0
    %304 = vmatpush1.msra.mxu0 %v274
    %305 = vmatprep.subr.mxu0 0.0
    %306 = vmatpush1.msra.mxu0 %v275
    %307 = vmatprep.subr.mxu0 0.0
    %308 = vmatpush1.msra.mxu0 %v276
    %309 = vmatprep.subr.mxu0 0.0
    %310 = vmatpush1.msra.mxu0 %v277
    %311 = vmatprep.subr.mxu0 0.0
    %312 = vmatpush1.msra.mxu0 %v278
    %313 = vmatprep.subr.mxu0 0.0
    %314 = vmatpush1.msra.mxu0 %v279
    %315 = vmatprep.subr.mxu0 0.0
    %316 = vmatpush1.msra.mxu0 %v280
    %317 = vmatprep.subr.mxu0 0.0
    %318 = vmatpush1.msra.mxu0 %v281
    %319 = vmatprep.subr.mxu0 0.0
    %320 = vmatpush1.msra.mxu0 %v282
    %321 = vmatprep.subr.mxu0 0.0
    %322 = vmatpush1.msra.mxu0 %v283
    %323 = vmatprep.subr.mxu0 0.0
    %324 = vmatpush1.msra.mxu0 0.0
    %325 = vmatprep.subr.mxu0 0.0
    %326 = vmatpush1.msra.mxu0 0.0
    %327 = vmatprep.subr.mxu0 0.0
    %328 = vmatpush1.msra.mxu0 0.0
    %329 = vmatprep.subr.mxu0 0.0
    %330 = vmatpush1.msra.mxu0 0.0
    %331 = vmatprep.subr.mxu0 0.0
    %332 = vmatpush1.msra.mxu0 0.0
    %333 = vmatprep.subr.mxu0 0.0
    %334 = vmatpush1.msra.mxu0 0.0
    %335 = vmatprep.subr.mxu0 0.0
    %336 = vmatpush1.msra.mxu0 0.0
    %337 = vmatprep.subr.mxu0 0.0
    %338 = vmatpush1.msra.mxu0 0.0
    %339 = vmatprep.subr.mxu0 0.0
    %340 = vmatpush1.msra.mxu0 0.0
    %341 = vmatprep.subr.mxu0 0.0
    %342 = vmatpush1.msra.mxu0 0.0
    %343 = vmatprep.subr.mxu0 0.0
    %344 = vmatpush1.msra.mxu0 0.0
    %345 = vmatprep.subr.mxu0 0.0
    %346 = vmatpush1.msra.mxu0 0.0
    %347 = vmatprep.subr.mxu0 0.0
    %348 = vmatpush1.msra.mxu0 0.0
    %349 = vmatprep.subr.mxu0 0.0
    %350 = vmatpush1.msra.mxu0 0.0
    %351 = vmatprep.subr.mxu0 0.0
    %352 = vmatpush1.msra.mxu0 0.0
    %353 = vmatprep.subr.mxu0 0.0
    %354 = vmatpush1.msra.mxu0 0.0
    %355 = vmatprep.mubr.f32.mxu0 0.0
    %356 = vmatmul.mubr.f32.gmra.mrb[0].mxu0 %v190
    %v357 = vpop.f32.mrb[0].mxu0
    %v358 = vadd.f32 %v289, %v357
    %v359 = vpop.f32.mrb[0].mxu0
    %360 = vmatprep.mubr.f32.mxu0 0.0
    %361 = vmatmul.mubr.f32.gmra.mrb[0].mxu0 %v195
    %v362 = vpop.f32.mrb[0].mxu0
    %v363 = vadd.f32 %v289, %v362
    %v364 = vpop.f32.mrb[0].mxu0
    %365 = vmatprep.mubr.f32.mxu0 0.0
    %366 = vmatmul.mubr.f32.gmra.mrb[0].mxu0 %v200
    %v367 = vpop.f32.mrb[0].mxu0
    %v368 = vadd.f32 %v289, %v367
    %v369 = vpop.f32.mrb[0].mxu0
    %370 = vmatprep.mubr.f32.mxu0 0.0
    %371 = vmatmul.mubr.f32.gmra.mrb[0].mxu0 %v205
    %v372 = vpop.f32.mrb[0].mxu0
    %v373 = vadd.f32 %v289, %v372
    %v374 = vpop.f32.mrb[0].mxu0
    %375 = vmatprep.mubr.f32.mxu0 0.0
    %376 = vmatmul.mubr.f32.gmra.mrb[0].mxu0 %v210
    %v377 = vpop.f32.mrb[0].mxu0
    %v378 = vadd.f32 %v289, %v377
    %v379 = vpop.f32.mrb[0].mxu0
    %380 = vmatprep.mubr.f32.mxu0 0.0
    %381 = vmatmul.mubr.f32.gmra.mrb[0].mxu0 %v215
    %v382 = vpop.f32.mrb[0].mxu0
    %v383 = vadd.f32 %v289, %v382
    %v384 = vpop.f32.mrb[0].mxu0
    %385 = vmatprep.mubr.f32.mxu0 0.0
    %386 = vmatmul.mubr.f32.gmra.mrb[0].mxu0 %v220
    %v387 = vpop.f32.mrb[0].mxu0
    %v388 = vadd.f32 %v289, %v387
    %v389 = vpop.f32.mrb[0].mxu0
    %390 = vmatprep.mubr.f32.mxu0 0.0
    %391 = vmatmul.mubr.f32.gmra.mrb[0].mxu0 %v225
    %v392 = vpop.f32.mrb[0].mxu0
    %v393 = vadd.f32 %v289, %v392
    %v394 = vpop.f32.mrb[0].mxu0
    %395 = vmatprep.mubr.f32.mxu0 0.0
    %396 = vmatmul.mubr.f32.gmra.mrb[0].mxu0 %v230
    %v397 = vpop.f32.mrb[0].mxu0
    %v398 = vadd.f32 %v289, %v397
    %v399 = vpop.f32.mrb[0].mxu0
    %400 = vmatprep.mubr.f32.mxu0 0.0
    %401 = vmatmul.mubr.f32.gmra.mrb[0].mxu0 %v235
    %v402 = vpop.f32.mrb[0].mxu0
    %v403 = vadd.f32 %v289, %v402
    %v404 = vpop.f32.mrb[0].mxu0
    %405 = vmatprep.mubr.f32.mxu0 0.0
    %406 = vmatmul.mubr.f32.gmra.mrb[0].mxu0 %v240
    %v407 = vpop.f32.mrb[0].mxu0
    %v408 = vadd.f32 %v289, %v407
    %v409 = vpop.f32.mrb[0].mxu0
    %410 = vmatprep.mubr.f32.mxu0 0.0
    %411 = vmatmul.mubr.f32.gmra.mrb[0].mxu0 %v245
    %v412 = vpop.f32.mrb[0].mxu0
    %v413 = vadd.f32 %v289, %v412
    %v414 = vpop.f32.mrb[0].mxu0
    %415 = vmatprep.mubr.f32.mxu0 0.0
    %416 = vmatmul.mubr.f32.gmra.mrb[0].mxu0 %v250
    %v417 = vpop.f32.mrb[0].mxu0
    %v418 = vadd.f32 %v289, %v417
    %v419 = vpop.f32.mrb[0].mxu0
    %420 = vmatprep.mubr.f32.mxu0 0.0
    %421 = vmatmul.mubr.f32.gmra.mrb[0].mxu0 %v255
    %v422 = vpop.f32.mrb[0].mxu0
    %v423 = vadd.f32 %v289, %v422
    %v424 = vpop.f32.mrb[0].mxu0
    %425 = vmatprep.mubr.f32.mxu0 0.0
    %426 = vmatmul.mubr.f32.gmra.mrb[0].mxu0 %v260
    %v427 = vpop.f32.mrb[0].mxu0
    %v428 = vadd.f32 %v289, %v427
    %v429 = vpop.f32.mrb[0].mxu0
    %430 = vmatprep.mubr.f32.mxu0 0.0
    %431 = vmatmul.mubr.f32.gmra.mrb[0].mxu0 %v265
    %v432 = vpop.f32.mrb[0].mxu0
    %v433 = vadd.f32 %v289, %v432
    %v434 = vpop.f32.mrb[0].mxu0
    %435 = vdwg.mxu0
    %v436 = vmax.f32 %v358, 0.0
    %v437 = vmax.f32 %v363, 0.0
    %v438 = vmax.f32 %v368, 0.0
    %v439 = vmax.f32 %v373, 0.0
    %v440 = vmax.f32 %v378, 0.0
    %v441 = vmax.f32 %v383, 0.0
    %v442 = vmax.f32 %v388, 0.0
    %v443 = vmax.f32 %v393, 0.0
    %v444 = vmax.f32 %v398, 0.0
    %v445 = vmax.f32 %v403, 0.0
    %v446 = vmax.f32 %v408, 0.0
    %v447 = vmax.f32 %v413, 0.0
    %v448 = vmax.f32 %v418, 0.0
    %v449 = vmax.f32 %v423, 0.0
    %v450 = vmax.f32 %v428, 0.0
    %v451 = vmax.f32 %v433, 0.0
    %452 = vst [vmem:[#allocation2] sm:$0xff] %v436
    %453 = vst [vmem:[#allocation2 + $0x8] sm:$0xff] %v437
    %454 = vst [vmem:[#allocation2 + $0x10] sm:$0xff] %v438
    %455 = vst [vmem:[#allocation2 + $0x18] sm:$0xff] %v439
    %456 = vst [vmem:[#allocation2 + $0x20] sm:$0xff] %v440
    %457 = vst [vmem:[#allocation2 + $0x28] sm:$0xff] %v441
    %458 = vst [vmem:[#allocation2 + $0x30] sm:$0xff] %v442
    %459 = vst [vmem:[#allocation2 + $0x38] sm:$0xff] %v443
    %460 = vst [vmem:[#allocation2 + $0x40] sm:$0xff] %v444
    %461 = vst [vmem:[#allocation2 + $0x48] sm:$0xff] %v445
    %462 = vst [vmem:[#allocation2 + $0x50] sm:$0xff] %v446
    %463 = vst [vmem:[#allocation2 + $0x58] sm:$0xff] %v447
    %464 = vst [vmem:[#allocation2 + $0x60] sm:$0xff] %v448
    %465 = vst [vmem:[#allocation2 + $0x68] sm:$0xff] %v449
    %466 = vst [vmem:[#allocation2 + $0x70] sm:$0xff] %v450
    %467 = vst [vmem:[#allocation2 + $0x78] sm:$0xff] %v451
    %v468 = vld [vmem:[#allocation3] sm:$0xff]
    %v469 = vld [vmem:[#allocation3 + $0x8] sm:$0xff]
    %v470 = vld [vmem:[#allocation3 + $0x10] sm:$0xff]
    %v471 = vld [vmem:[#allocation3 + $0x18] sm:$0xff]
    %v472 = vld [vmem:[#allocation3 + $0x20] sm:$0xff]
    %v473 = vld [vmem:[#allocation3 + $0x28] sm:$0xff]
    %v474 = vld [vmem:[#allocation3 + $0x30] sm:$0xff]
    %v475 = vld [vmem:[#allocation3 + $0x38] sm:$0xff]
    %v476 = vld [vmem:[#allocation3 + $0x40] sm:$0xff]
    %v477 = vld [vmem:[#allocation3 + $0x48] sm:$0xff]
    %v478 = vld [vmem:[#allocation3 + $0x50] sm:$0xff]
    %v479 = vld [vmem:[#allocation3 + $0x58] sm:$0xff]
    %v480 = vld [vmem:[#allocation3 + $0x60] sm:$0xff]
    %v481 = vld [vmem:[#allocation3 + $0x68] sm:$0xff]
    %v482 = vld [vmem:[#allocation3 + $0x70] sm:$0xff]
    %v483 = vld [vmem:[#allocation3 + $0x78] sm:$0xff]
    %v484 = vld [vmem:[#allocation2] sm:$0xff]
    %v485 = vld [vmem:[#allocation2 + $0x8] sm:$0xff]
    %v486 = vld [vmem:[#allocation2 + $0x10] sm:$0xff]
    %v487 = vld [vmem:[#allocation2 + $0x18] sm:$0xff]
    %v488 = vld [vmem:[#allocation2 + $0x20] sm:$0xff]
    %v489 = vld [vmem:[#allocation2 + $0x28] sm:$0xff]
    %v490 = vld [vmem:[#allocation2 + $0x30] sm:$0xff]
    %v491 = vld [vmem:[#allocation2 + $0x38] sm:$0xff]
    %v492 = vld [vmem:[#allocation2 + $0x40] sm:$0xff]
    %v493 = vld [vmem:[#allocation2 + $0x48] sm:$0xff]
    %v494 = vld [vmem:[#allocation2 + $0x50] sm:$0xff]
    %v495 = vld [vmem:[#allocation2 + $0x58] sm:$0xff]
    %v496 = vld [vmem:[#allocation2 + $0x60] sm:$0xff]
    %v497 = vld [vmem:[#allocation2 + $0x68] sm:$0xff]
    %v498 = vld [vmem:[#allocation2 + $0x70] sm:$0xff]
    %v499 = vld [vmem:[#allocation2 + $0x78] sm:$0xff]
    %500 = vmatprep.subr.mxu0 0.0
    %501 = vmatpush1.msra.mxu0 %v484
    %502 = vmatprep.subr.mxu0 0.0
    %503 = vmatpush1.msra.mxu0 %v485
    %504 = vmatprep.subr.mxu0 0.0
    %505 = vmatpush1.msra.mxu0 %v486
    %506 = vmatprep.subr.mxu0 0.0
    %507 = vmatpush1.msra.mxu0 %v487
    %508 = vmatprep.subr.mxu0 0.0
    %509 = vmatpush1.msra.mxu0 %v488
    %510 = vmatprep.subr.mxu0 0.0
    %511 = vmatpush1.msra.mxu0 %v489
    %512 = vmatprep.subr.mxu0 0.0
    %513 = vmatpush1.msra.mxu0 %v490
    %514 = vmatprep.subr.mxu0 0.0
    %515 = vmatpush1.msra.mxu0 %v491
    %516 = vmatprep.subr.mxu0 0.0
    %517 = vmatpush1.msra.mxu0 %v492
    %518 = vmatprep.subr.mxu0 0.0
    %519 = vmatpush1.msra.mxu0 %v493
    %520 = vmatprep.subr.mxu0 0.0
    %521 = vmatpush1.msra.mxu0 %v494
    %522 = vmatprep.subr.mxu0 0.0
    %523 = vmatpush1.msra.mxu0 %v495
    %524 = vmatprep.subr.mxu0 0.0
    %525 = vmatpush1.msra.mxu0 %v496
    %526 = vmatprep.subr.mxu0 0.0
    %527 = vmatpush1.msra.mxu0 %v497
    %528 = vmatprep.subr.mxu0 0.0
    %529 = vmatpush1.msra.mxu0 %v498
    %530 = vmatprep.subr.mxu0 0.0
    %531 = vmatpush1.msra.mxu0 %v499
    %532 = vmatprep.subr.mxu0 0.0
    %533 = vmatpush1.msra.mxu0 0.0
    %534 = vmatprep.subr.mxu0 0.0
    %535 = vmatpush1.msra.mxu0 0.0
    %536 = vmatprep.subr.mxu0 0.0
    %537 = vmatpush1.msra.mxu0 0.0
    %538 = vmatprep.subr.mxu0 0.0
    %539 = vmatpush1.msra.mxu0 0.0
    %540 = vmatprep.subr.mxu0 0.0
    %541 = vmatpush1.msra.mxu0 0.0
    %542 = vmatprep.subr.mxu0 0.0
    %543 = vmatpush1.msra.mxu0 0.0
    %544 = vmatprep.subr.mxu0 0.0
    %545 = vmatpush1.msra.mxu0 0.0
    %546 = vmatprep.subr.mxu0 0.0
    %547 = vmatpush1.msra.mxu0 0.0
    %548 = vmatprep.subr.mxu0 0.0
    %549 = vmatpush1.msra.mxu0 0.0
    %550 = vmatprep.subr.mxu0 0.0
    %551 = vmatpush1.msra.mxu0 0.0
    %552 = vmatprep.subr.mxu0 0.0
    %553 = vmatpush1.msra.mxu0 0.0
    %554 = vmatprep.subr.mxu0 0.0
    %555 = vmatpush1.msra.mxu0 0.0
    %556 = vmatprep.subr.mxu0 0.0
    %557 = vmatpush1.msra.mxu0 0.0
    %558 = vmatprep.subr.mxu0 0.0
    %559 = vmatpush1.msra.mxu0 0.0
    %560 = vmatprep.subr.mxu0 0.0
    %561 = vmatpush1.msra.mxu0 0.0
    %562 = vmatprep.subr.mxu0 0.0
    %563 = vmatpush1.msra.mxu0 0.0
    %564 = vmatprep.mubr.f32.mxu0 0.0
    %565 = vmatmul.mubr.f32.gmra.mrb[0].mxu0 %v468
    %v566 = vpop.f32.mrb[0].mxu0
    %v567 = vadd.f32 0.0, %v566
    %v568 = vpop.f32.mrb[0].mxu0
    %569 = vmatprep.mubr.f32.mxu0 0.0
    %570 = vmatmul.mubr.f32.gmra.mrb[0].mxu0 %v469
    %v571 = vpop.f32.mrb[0].mxu0
    %v572 = vadd.f32 0.0, %v571
    %v573 = vpop.f32.mrb[0].mxu0
    %574 = vmatprep.mubr.f32.mxu0 0.0
    %575 = vmatmul.mubr.f32.gmra.mrb[0].mxu0 %v470
    %v576 = vpop.f32.mrb[0].mxu0
    %v577 = vadd.f32 0.0, %v576
    %v578 = vpop.f32.mrb[0].mxu0
    %579 = vmatprep.mubr.f32.mxu0 0.0
    %580 = vmatmul.mubr.f32.gmra.mrb[0].mxu0 %v471
    %v581 = vpop.f32.mrb[0].mxu0
    %v582 = vadd.f32 0.0, %v581
    %v583 = vpop.f32.mrb[0].mxu0
    %584 = vmatprep.mubr.f32.mxu0 0.0
    %585 = vmatmul.mubr.f32.gmra.mrb[0].mxu0 %v472
    %v586 = vpop.f32.mrb[0].mxu0
    %v587 = vadd.f32 0.0, %v586
    %v588 = vpop.f32.mrb[0].mxu0
    %589 = vmatprep.mubr.f32.mxu0 0.0
    %590 = vmatmul.mubr.f32.gmra.mrb[0].mxu0 %v473
    %v591 = vpop.f32.mrb[0].mxu0
    %v592 = vadd.f32 0.0, %v591
    %v593 = vpop.f32.mrb[0].mxu0
    %594 = vmatprep.mubr.f32.mxu0 0.0
    %595 = vmatmul.mubr.f32.gmra.mrb[0].mxu0 %v474
    %v596 = vpop.f32.mrb[0].mxu0
    %v597 = vadd.f32 0.0, %v596
    %v598 = vpop.f32.mrb[0].mxu0
    %599 = vmatprep.mubr.f32.mxu0 0.0
    %600 = vmatmul.mubr.f32.gmra.mrb[0].mxu0 %v475
    %v601 = vpop.f32.mrb[0].mxu0
    %v602 = vadd.f32 0.0, %v601
    %v603 = vpop.f32.mrb[0].mxu0
    %604 = vmatprep.mubr.f32.mxu0 0.0
    %605 = vmatmul.mubr.f32.gmra.mrb[0].mxu0 %v476
    %v606 = vpop.f32.mrb[0].mxu0
    %v607 = vadd.f32 0.0, %v606
    %v608 = vpop.f32.mrb[0].mxu0
    %609 = vmatprep.mubr.f32.mxu0 0.0
    %610 = vmatmul.mubr.f32.gmra.mrb[0].mxu0 %v477
    %v611 = vpop.f32.mrb[0].mxu0
    %v612 = vadd.f32 0.0, %v611
    %v613 = vpop.f32.mrb[0].mxu0
    %614 = vmatprep.mubr.f32.mxu0 0.0
    %615 = vmatmul.mubr.f32.gmra.mrb[0].mxu0 %v478
    %v616 = vpop.f32.mrb[0].mxu0
    %v617 = vadd.f32 0.0, %v616
    %v618 = vpop.f32.mrb[0].mxu0
    %619 = vmatprep.mubr.f32.mxu0 0.0
    %620 = vmatmul.mubr.f32.gmra.mrb[0].mxu0 %v479
    %v621 = vpop.f32.mrb[0].mxu0
    %v622 = vadd.f32 0.0, %v621
    %v623 = vpop.f32.mrb[0].mxu0
    %624 = vmatprep.mubr.f32.mxu0 0.0
    %625 = vmatmul.mubr.f32.gmra.mrb[0].mxu0 %v480
    %v626 = vpop.f32.mrb[0].mxu0
    %v627 = vadd.f32 0.0, %v626
    %v628 = vpop.f32.mrb[0].mxu0
    %629 = vmatprep.mubr.f32.mxu0 0.0
    %630 = vmatmul.mubr.f32.gmra.mrb[0].mxu0 %v481
    %v631 = vpop.f32.mrb[0].mxu0
    %v632 = vadd.f32 0.0, %v631
    %v633 = vpop.f32.mrb[0].mxu0
    %634 = vmatprep.mubr.f32.mxu0 0.0
    %635 = vmatmul.mubr.f32.gmra.mrb[0].mxu0 %v482
    %v636 = vpop.f32.mrb[0].mxu0
    %v637 = vadd.f32 0.0, %v636
    %v638 = vpop.f32.mrb[0].mxu0
    %639 = vmatprep.mubr.f32.mxu0 0.0
    %640 = vmatmul.mubr.f32.gmra.mrb[0].mxu0 %v483
    %v641 = vpop.f32.mrb[0].mxu0
    %v642 = vadd.f32 0.0, %v641
    %v643 = vpop.f32.mrb[0].mxu0
    %644 = vdwg.mxu0
    %s645 = scalar_lea.vmem [#allocation8], 128
    %v646 = vld [vmem:[%s645] sm:$0xff]
    %v647 = vld [vmem:[%s645 + $0x8] sm:$0xff]
    %v648 = vld [vmem:[%s645 + $0x10] sm:$0xff]
    %v649 = vld [vmem:[%s645 + $0x18] sm:$0xff]
    %v650 = vld [vmem:[%s645 + $0x20] sm:$0xff]
    %v651 = vld [vmem:[%s645 + $0x28] sm:$0xff]
    %v652 = vld [vmem:[%s645 + $0x30] sm:$0xff]
    %v653 = vld [vmem:[%s645 + $0x38] sm:$0xff]
    %v654 = vld [vmem:[%s645 + $0x40] sm:$0xff]
    %v655 = vld [vmem:[%s645 + $0x48] sm:$0xff]
    %v656 = vld [vmem:[%s645 + $0x50] sm:$0xff]
    %v657 = vld [vmem:[%s645 + $0x58] sm:$0xff]
    %v658 = vld [vmem:[%s645 + $0x60] sm:$0xff]
    %v659 = vld [vmem:[%s645 + $0x68] sm:$0xff]
    %v660 = vld [vmem:[%s645 + $0x70] sm:$0xff]
    %v661 = vld [vmem:[%s645 + $0x78] sm:$0xff]
    %s662 = scalar_lea.vmem %s3, 1
    %v663 = vld [vmem:[%s662] sm:$0x1]
    %v665 = vlaneseq
    %v666 = vshrl.u32 %v665, 7
    %v667 = vsub.s32 0, %v666
    %v668 = vrot.slane %v663, %v667
    %670 = vmatprep.subr.mxu0 0.0
    %671 = vmatpush1.msra.mxu0 %v646
    %672 = vmatprep.subr.mxu0 0.0
    %673 = vmatpush1.msra.mxu0 %v647
    %674 = vmatprep.subr.mxu0 0.0
    %675 = vmatpush1.msra.mxu0 %v648
    %676 = vmatprep.subr.mxu0 0.0
    %677 = vmatpush1.msra.mxu0 %v649
    %678 = vmatprep.subr.mxu0 0.0
    %679 = vmatpush1.msra.mxu0 %v650
    %680 = vmatprep.subr.mxu0 0.0
    %681 = vmatpush1.msra.mxu0 %v651
    %682 = vmatprep.subr.mxu0 0.0
    %683 = vmatpush1.msra.mxu0 %v652
    %684 = vmatprep.subr.mxu0 0.0
    %685 = vmatpush1.msra.mxu0 %v653
    %686 = vmatprep.subr.mxu0 0.0
    %687 = vmatpush1.msra.mxu0 %v654
    %688 = vmatprep.subr.mxu0 0.0
    %689 = vmatpush1.msra.mxu0 %v655
    %690 = vmatprep.subr.mxu0 0.0
    %691 = vmatpush1.msra.mxu0 %v656
    %692 = vmatprep.subr.mxu0 0.0
    %693 = vmatpush1.msra.mxu0 %v657
    %694 = vmatprep.subr.mxu0 0.0
    %695 = vmatpush1.msra.mxu0 %v658
    %696 = vmatprep.subr.mxu0 0.0
    %697 = vmatpush1.msra.mxu0 %v659
    %698 = vmatprep.subr.mxu0 0.0
    %699 = vmatpush1.msra.mxu0 %v660
    %700 = vmatprep.subr.mxu0 0.0
    %701 = vmatpush1.msra.mxu0 %v661
    %702 = vmatprep.subr.mxu0 0.0
    %703 = vmatpush1.msra.mxu0 0.0
    %704 = vmatprep.subr.mxu0 0.0
    %705 = vmatpush1.msra.mxu0 0.0
    %706 = vmatprep.subr.mxu0 0.0
    %707 = vmatpush1.msra.mxu0 0.0
    %708 = vmatprep.subr.mxu0 0.0
    %709 = vmatpush1.msra.mxu0 0.0
    %710 = vmatprep.subr.mxu0 0.0
    %711 = vmatpush1.msra.mxu0 0.0
    %712 = vmatprep.subr.mxu0 0.0
    %713 = vmatpush1.msra.mxu0 0.0
    %714 = vmatprep.subr.mxu0 0.0
    %715 = vmatpush1.msra.mxu0 0.0
    %716 = vmatprep.subr.mxu0 0.0
    %717 = vmatpush1.msra.mxu0 0.0
    %718 = vmatprep.subr.mxu0 0.0
    %719 = vmatpush1.msra.mxu0 0.0
    %720 = vmatprep.subr.mxu0 0.0
    %721 = vmatpush1.msra.mxu0 0.0
    %722 = vmatprep.subr.mxu0 0.0
    %723 = vmatpush1.msra.mxu0 0.0
    %724 = vmatprep.subr.mxu0 0.0
    %725 = vmatpush1.msra.mxu0 0.0
    %726 = vmatprep.subr.mxu0 0.0
    %727 = vmatpush1.msra.mxu0 0.0
    %728 = vmatprep.subr.mxu0 0.0
    %729 = vmatpush1.msra.mxu0 0.0
    %730 = vmatprep.subr.mxu0 0.0
    %731 = vmatpush1.msra.mxu0 0.0
    %732 = vmatprep.subr.mxu0 0.0
    %733 = vmatpush1.msra.mxu0 0.0
    %734 = vmatprep.mubr.f32.mxu0 0.0
    %735 = vmatmul.mubr.f32.gmra.mrb[0].mxu0 %v567
    %v736 = vpop.f32.mrb[0].mxu0
    %v737 = vadd.f32 %v668, %v736
    %v738 = vpop.f32.mrb[0].mxu0
    %739 = vmatprep.mubr.f32.mxu0 0.0
    %740 = vmatmul.mubr.f32.gmra.mrb[0].mxu0 %v572
    %v741 = vpop.f32.mrb[0].mxu0
    %v742 = vadd.f32 %v668, %v741
    %v743 = vpop.f32.mrb[0].mxu0
    %744 = vmatprep.mubr.f32.mxu0 0.0
    %745 = vmatmul.mubr.f32.gmra.mrb[0].mxu0 %v577
    %v746 = vpop.f32.mrb[0].mxu0
    %v747 = vadd.f32 %v668, %v746
    %v748 = vpop.f32.mrb[0].mxu0
    %749 = vmatprep.mubr.f32.mxu0 0.0
    %750 = vmatmul.mubr.f32.gmra.mrb[0].mxu0 %v582
    %v751 = vpop.f32.mrb[0].mxu0
    %v752 = vadd.f32 %v668, %v751
    %v753 = vpop.f32.mrb[0].mxu0
    %754 = vmatprep.mubr.f32.mxu0 0.0
    %755 = vmatmul.mubr.f32.gmra.mrb[0].mxu0 %v587
    %v756 = vpop.f32.mrb[0].mxu0
    %v757 = vadd.f32 %v668, %v756
    %v758 = vpop.f32.mrb[0].mxu0
    %759 = vmatprep.mubr.f32.mxu0 0.0
    %760 = vmatmul.mubr.f32.gmra.mrb[0].mxu0 %v592
    %v761 = vpop.f32.mrb[0].mxu0
    %v762 = vadd.f32 %v668, %v761
    %v763 = vpop.f32.mrb[0].mxu0
    %764 = vmatprep.mubr.f32.mxu0 0.0
    %765 = vmatmul.mubr.f32.gmra.mrb[0].mxu0 %v597
    %v766 = vpop.f32.mrb[0].mxu0
    %v767 = vadd.f32 %v668, %v766
    %v768 = vpop.f32.mrb[0].mxu0
    %769 = vmatprep.mubr.f32.mxu0 0.0
    %770 = vmatmul.mubr.f32.gmra.mrb[0].mxu0 %v602
    %v771 = vpop.f32.mrb[0].mxu0
    %v772 = vadd.f32 %v668, %v771
    %v773 = vpop.f32.mrb[0].mxu0
    %774 = vmatprep.mubr.f32.mxu0 0.0
    %775 = vmatmul.mubr.f32.gmra.mrb[0].mxu0 %v607
    %v776 = vpop.f32.mrb[0].mxu0
    %v777 = vadd.f32 %v668, %v776
    %v778 = vpop.f32.mrb[0].mxu0
    %779 = vmatprep.mubr.f32.mxu0 0.0
    %780 = vmatmul.mubr.f32.gmra.mrb[0].mxu0 %v612
    %v781 = vpop.f32.mrb[0].mxu0
    %v782 = vadd.f32 %v668, %v781
    %v783 = vpop.f32.mrb[0].mxu0
    %784 = vmatprep.mubr.f32.mxu0 0.0
    %785 = vmatmul.mubr.f32.gmra.mrb[0].mxu0 %v617
    %v786 = vpop.f32.mrb[0].mxu0
    %v787 = vadd.f32 %v668, %v786
    %v788 = vpop.f32.mrb[0].mxu0
    %789 = vmatprep.mubr.f32.mxu0 0.0
    %790 = vmatmul.mubr.f32.gmra.mrb[0].mxu0 %v622
    %v791 = vpop.f32.mrb[0].mxu0
    %v792 = vadd.f32 %v668, %v791
    %v793 = vpop.f32.mrb[0].mxu0
    %794 = vmatprep.mubr.f32.mxu0 0.0
    %795 = vmatmul.mubr.f32.gmra.mrb[0].mxu0 %v627
    %v796 = vpop.f32.mrb[0].mxu0
    %v797 = vadd.f32 %v668, %v796
    %v798 = vpop.f32.mrb[0].mxu0
    %799 = vmatprep.mubr.f32.mxu0 0.0
    %800 = vmatmul.mubr.f32.gmra.mrb[0].mxu0 %v632
    %v801 = vpop.f32.mrb[0].mxu0
    %v802 = vadd.f32 %v668, %v801
    %v803 = vpop.f32.mrb[0].mxu0
    %804 = vmatprep.mubr.f32.mxu0 0.0
    %805 = vmatmul.mubr.f32.gmra.mrb[0].mxu0 %v637
    %v806 = vpop.f32.mrb[0].mxu0
    %v807 = vadd.f32 %v668, %v806
    %v808 = vpop.f32.mrb[0].mxu0
    %809 = vmatprep.mubr.f32.mxu0 0.0
    %810 = vmatmul.mubr.f32.gmra.mrb[0].mxu0 %v642
    %v811 = vpop.f32.mrb[0].mxu0
    %v812 = vadd.f32 %v668, %v811
    %v813 = vpop.f32.mrb[0].mxu0
    %814 = vdwg.mxu0
    %v815 = vmax.f32 %v737, 0.0
    %v816 = vmax.f32 %v742, 0.0
    %v817 = vmax.f32 %v747, 0.0
    %v818 = vmax.f32 %v752, 0.0
    %v819 = vmax.f32 %v757, 0.0
    %v820 = vmax.f32 %v762, 0.0
    %v821 = vmax.f32 %v767, 0.0
    %v822 = vmax.f32 %v772, 0.0
    %v823 = vmax.f32 %v777, 0.0
    %v824 = vmax.f32 %v782, 0.0
    %v825 = vmax.f32 %v787, 0.0
    %v826 = vmax.f32 %v792, 0.0
    %v827 = vmax.f32 %v797, 0.0
    %v828 = vmax.f32 %v802, 0.0
    %v829 = vmax.f32 %v807, 0.0
    %v830 = vmax.f32 %v812, 0.0
    %831 = vst [vmem:[#allocation2] sm:$0xff] %v815
    %832 = vst [vmem:[#allocation2 + $0x8] sm:$0xff] %v816
    %833 = vst [vmem:[#allocation2 + $0x10] sm:$0xff] %v817
    %834 = vst [vmem:[#allocation2 + $0x18] sm:$0xff] %v818
    %835 = vst [vmem:[#allocation2 + $0x20] sm:$0xff] %v819
    %836 = vst [vmem:[#allocation2 + $0x28] sm:$0xff] %v820
    %837 = vst [vmem:[#allocation2 + $0x30] sm:$0xff] %v821
    %838 = vst [vmem:[#allocation2 + $0x38] sm:$0xff] %v822
    %839 = vst [vmem:[#allocation2 + $0x40] sm:$0xff] %v823
    %840 = vst [vmem:[#allocation2 + $0x48] sm:$0xff] %v824
    %841 = vst [vmem:[#allocation2 + $0x50] sm:$0xff] %v825
    %842 = vst [vmem:[#allocation2 + $0x58] sm:$0xff] %v826
    %843 = vst [vmem:[#allocation2 + $0x60] sm:$0xff] %v827
    %844 = vst [vmem:[#allocation2 + $0x68] sm:$0xff] %v828
    %845 = vst [vmem:[#allocation2 + $0x70] sm:$0xff] %v829
    %846 = vst [vmem:[#allocation2 + $0x78] sm:$0xff] %v830
    %v847 = vld [vmem:[#allocation2] sm:$0xff]
    %v848 = vld [vmem:[#allocation2 + $0x8] sm:$0xff]
    %v849 = vld [vmem:[#allocation2 + $0x10] sm:$0xff]
    %v850 = vld [vmem:[#allocation2 + $0x18] sm:$0xff]
    %v851 = vld [vmem:[#allocation2 + $0x20] sm:$0xff]
    %v852 = vld [vmem:[#allocation2 + $0x28] sm:$0xff]
    %v853 = vld [vmem:[#allocation2 + $0x30] sm:$0xff]
    %v854 = vld [vmem:[#allocation2 + $0x38] sm:$0xff]
    %v855 = vld [vmem:[#allocation2 + $0x40] sm:$0xff]
    %v856 = vld [vmem:[#allocation2 + $0x48] sm:$0xff]
    %v857 = vld [vmem:[#allocation2 + $0x50] sm:$0xff]
    %v858 = vld [vmem:[#allocation2 + $0x58] sm:$0xff]
    %v859 = vld [vmem:[#allocation2 + $0x60] sm:$0xff]
    %v860 = vld [vmem:[#allocation2 + $0x68] sm:$0xff]
    %v861 = vld [vmem:[#allocation2 + $0x70] sm:$0xff]
    %v862 = vld [vmem:[#allocation2 + $0x78] sm:$0xff]
    %863 = vst [vmem:[#allocation9] sm:$0xff] %v847
    %864 = vst [vmem:[#allocation9 + $0x8] sm:$0xff] %v848
    %865 = vst [vmem:[#allocation9 + $0x10] sm:$0xff] %v849
    %866 = vst [vmem:[#allocation9 + $0x18] sm:$0xff] %v850
    %867 = vst [vmem:[#allocation9 + $0x20] sm:$0xff] %v851
    %868 = vst [vmem:[#allocation9 + $0x28] sm:$0xff] %v852
    %869 = vst [vmem:[#allocation9 + $0x30] sm:$0xff] %v853
    %870 = vst [vmem:[#allocation9 + $0x38] sm:$0xff] %v854
    %871 = vst [vmem:[#allocation9 + $0x40] sm:$0xff] %v855
    %872 = vst [vmem:[#allocation9 + $0x48] sm:$0xff] %v856
    %873 = vst [vmem:[#allocation9 + $0x50] sm:$0xff] %v857
    %874 = vst [vmem:[#allocation9 + $0x58] sm:$0xff] %v858
    %875 = vst [vmem:[#allocation9 + $0x60] sm:$0xff] %v859
    %876 = vst [vmem:[#allocation9 + $0x68] sm:$0xff] %v860
    %877 = vst [vmem:[#allocation9 + $0x70] sm:$0xff] %v861
    %878 = vst [vmem:[#allocation9 + $0x78] sm:$0xff] %v862
    // Predicated region
    $region30: #{tpu_custom_call.1} parent=1 // pred_check
      _
    $region31: #{tpu_custom_call.1} parent=1 // pred_check_branch
      %880 = sbr.rel (0) target = $region33
    $region32: #{tpu_custom_call.1} parent=1 // pred_region
      %s882 = ssub.s32 2048, 2048
      %883 = vsyncadd [#allocation5], %s882
      %s884 = sshll.u32 [#allocation9], 4
      %s885 = int_to_ptr.vmem [resolvable:$true] %s884
      %890 = dma.vmem_to_hbm [thread:$0]  %s885, 2048, %s4, [#allocation5], 128, 128, 8
    $region33: #{tpu_custom_call.1} parent=1 // pred_fallthru
      _
    // Predicated region
    $region34: #{tpu_custom_call.1} parent=1 // pred_check
      _
    $region35: #{tpu_custom_call.1} parent=1 // pred_check_branch
      %892 = sbr.rel (0) target = $region37
    $region36: #{tpu_custom_call.1} parent=1 // pred_region
      %893 = dma.done [#allocation5], 2048
    $region37: #{tpu_custom_call.1} parent=1 // pred_fallthru
      _
    %894 = vsyncpa [#allocation4], 1
    %895 = vsyncpa [#allocation7], 1
    %896 = vsyncpa [#allocation5], 1

</llo_original>
